<compile_context>
chip_gen: v5e
topology: v5e:2x2
jax: 0.10.0
libtpu: 0.0.40
codegen_flags: <defaults>
</compile_context>

<pallas_src>
import jax
import jax.numpy as jnp
from jax.experimental import pallas as pl
from jax.experimental.pallas import tpu as pltpu


def _round_up(x, m):
    return (x + m - 1) // m * m


def _make_conv_matmul_kernel(dropout, seed):
    """Kernel factory: plain matmul, or matmul + inverted dropout (static switch)."""
    if dropout > 0.0:
        inv_keep = 1.0 / (1.0 - dropout)

        def kernel(a_ref, b_ref, o_ref):
            acc = jnp.dot(a_ref[...], b_ref[...],
                          preferred_element_type=jnp.float32)
            # Per-block seed so tiles get independent masks.
            pltpu.prng_seed(seed + pl.program_id(0))
            bits = pltpu.prng_random_bits(acc.shape)
            u = (bits & 0xFFFFFF).astype(jnp.float32) * (1.0 / (1 << 24))
            acc = jnp.where(u >= dropout, acc * inv_keep, 0.0)
            o_ref[...] = acc.astype(o_ref.dtype)
    else:
        def kernel(a_ref, b_ref, o_ref):
            o_ref[...] = jnp.dot(
                a_ref[...], b_ref[...], preferred_element_type=jnp.float32
            ).astype(o_ref.dtype)

    return kernel


def _pallas_conv_matmul(patches, w_flat, *, dropout=0.0, seed=0):
    """patches: (M, K) bf16, w_flat: (K, N) bf16 -> (M, N) f32.

    Tiled over M (double-buffered by BlockSpec), weight block resident across
    grid steps, padded K/N so tiles are (8,128)-aligned and the output store
    is lane-dense.
    """
    M, K = patches.shape
    K2, N = w_flat.shape
    assert K == K2

    Kp = _round_up(K, 128)          # full K per block (K = Cin*16 stays small)
    Np = _round_up(N, 128)          # lane-dense output: last dim >= 128, unmasked vst
    TM = min(512, _round_up(M, 8))  # 512-row M tiles: ~85% of HBM roofline
    Mp = _round_up(M, TM)

    a = jnp.pad(patches, ((0, Mp - M), (0, Kp - K)))
    b = jnp.pad(w_flat, ((0, Kp - K), (0, Np - N)))

    # Per-block VMEM (double-buffered): 2*(TM*Kp + Kp*Np)*2B + 2*TM*Np*4B —
    # a few MiB for realistic Cin; well under v7x's 32 MiB scoped / 64 MiB phys.
    cost = pl.CostEstimate(
        flops=2 * Mp * Kp * Np,
        transcendentals=0,
        bytes_accessed=Mp * Kp * 2 + Kp * Np * 2 + Mp * Np * 4,
    )

    out = pl.pallas_call(
        _make_conv_matmul_kernel(float(dropout), int(seed)),
        out_shape=jax.ShapeDtypeStruct((Mp, Np), jnp.float32),
        grid_spec=pltpu.PrefetchScalarGridSpec(
            num_scalar_prefetch=0,
            grid=(Mp // TM,),
            in_specs=[
                pl.BlockSpec((TM, Kp), lambda i: (i, 0)),   # streaming patches
                pl.BlockSpec((Kp, Np), lambda i: (0, 0)),   # resident weight
            ],
            out_specs=pl.BlockSpec((TM, Np), lambda i: (i, 0)),
        ),
        compiler_params=pltpu.CompilerParams(
            dimension_semantics=("parallel",),   # shards M across v7x's 2 TCs
            vmem_limit_bytes=32 * 1024 * 1024,   # explicit; safe on v5e/v6e/v7x
        ),
        cost_estimate=cost,
    )(a, b)

    return out[:M, :N]


def default_layer_down(x_nchw, weight, dropout=0.0, training=False, seed=0):
    """Forward pass of DefaultLayerDown.

    x_nchw : (B, Cin, H, W)   float32/bf16
    weight : (Cout, Cin, 4, 4) PyTorch Conv2d OIHW layout
    dropout: nn.Dropout p; only active when training=True (eval == identity).
    Returns: (B, Cout, Ho, Wo) float32, Ho = Wo = H//2 for even H, W.
    """
    B, Cin, H, W = x_nchw.shape
    Cout = weight.shape[0]
    KH = KW = 4
    Ho = (H + 2 - KH) // 2 + 1
    Wo = (W + 2 - KW) // 2 + 1

    # Cast to bf16 BEFORE im2col (halves HBM traffic of the expanded patch
    # buffer; MXU runs at bf16 peak with f32 accumulation in the kernel).
    x = jnp.transpose(x_nchw.astype(jnp.bfloat16), (0, 2, 3, 1))   # NHWC
    xp = jnp.pad(x, ((0, 0), (1, 1), (1, 1), (0, 0)))

    cols = []
    for kh in range(KH):
        for kw in range(KW):
            cols.append(xp[:, kh:kh + 2 * Ho:2, kw:kw + 2 * Wo:2, :])  # (B,Ho,Wo,Cin)
    # (B, Ho, Wo, Cin, 16) -> (B*Ho*Wo, Cin*16); matches OIHW weight flattening.
    patches = jnp.stack(cols, axis=-1).reshape(B * Ho * Wo, Cin * KH * KW)

    w_flat = weight.astype(jnp.bfloat16).reshape(Cout, Cin * KH * KW).T  # (K, Cout)

    drop_p = float(dropout) if training else 0.0
    out_flat = _pallas_conv_matmul(patches, w_flat, dropout=drop_p, seed=seed)

    return out_flat.reshape(B, Ho, Wo, Cout).transpose(0, 3, 1, 2)


if __name__ == "__main__":
    # Small deterministic example consistent with the module.
    B, Cin, H, W = 2, 4, 16, 16
    Cout = 8

    key = jax.random.PRNGKey(0)
    kx, kw = jax.random.split(key)
    x = jax.random.normal(kx, (B, Cin, H, W), dtype=jnp.float32)
    # Deterministic "kaiming-uniform-like" weight init (synthetic, no checkpoint).
    fan_in = Cin * 4 * 4
    bound = 1.0 / jnp.sqrt(fan_in)
    weight = jax.random.uniform(
        kw, (Cout, Cin, 4, 4), minval=-bound, maxval=bound, dtype=jnp.float32
    )

    out = default_layer_down(x, weight, dropout=0.0)
    out = jax.block_until_ready(out)

    # Reference: XLA conv with the same bf16 inputs and f32 accumulation.
    ref = jax.lax.conv_general_dilated(
        x.astype(jnp.bfloat16), weight.astype(jnp.bfloat16),
        window_strides=(2, 2), padding=((1, 1), (1, 1)),
        dimension_numbers=("NCHW", "OIHW", "NCHW"),
        preferred_element_type=jnp.float32,
    )
    assert out.shape == (B, Cout, H // 2, W // 2)
    assert jnp.allclose(out, ref, atol=2e-3, rtol=2e-3), float(
        jnp.max(jnp.abs(out - ref))
    )

    print("KERNEL_OK")
</pallas_src>

<mosaic_0001>
module attributes {stable_mosaic.version = 11 : i64} {
  func.func @kernel(%arg0: i32, %arg1: memref<128x128xbf16, #tpu.memory_space<vmem>>, %arg2: memref<128x128xbf16, #tpu.memory_space<vmem>>, %arg3: memref<128x128xf32, #tpu.memory_space<vmem>>) attributes {dimension_semantics = [#tpu.dimension_semantics<parallel>], iteration_bounds = array<i64: 1>, scalar_prefetch = 0 : i64, scratch_operands = 0 : i64, tpu.core_type = #tpu.core_type<tc>, window_params = [{transform_indices = @transform_0, window_bounds = array<i64: 128, 128>}, {pipeline_mode = #tpu.pipeline_mode<synchronous>, transform_indices = @transform_1, window_bounds = array<i64: 128, 128>}, {transform_indices = @transform_2, window_bounds = array<i64: 128, 128>}]} {
    %c0 = arith.constant 0 : index
    %c0_0 = arith.constant 0 : index
    %0 = vector.load %arg1[%c0, %c0_0] : memref<128x128xbf16, #tpu.memory_space<vmem>>, vector<128x128xbf16>
    %c0_1 = arith.constant 0 : index
    %c0_2 = arith.constant 0 : index
    %1 = vector.load %arg2[%c0_1, %c0_2] : memref<128x128xbf16, #tpu.memory_space<vmem>>, vector<128x128xbf16>
    %cst = arith.constant dense<0.000000e+00> : vector<128x128xf32>
    %2 = tpu.matmul %0, %1, %cst {dimension_numbers = #tpu.dot_dimension_numbers<[1], [0], [0], [1], [0, 0, 1, 1], [], []>} : vector<128x128xbf16>, vector<128x128xbf16>, vector<128x128xf32> -> vector<128x128xf32>
    %c0_3 = arith.constant 0 : index
    %c0_4 = arith.constant 0 : index
    %3 = vector.load %arg3[%c0_3, %c0_4] : memref<128x128xf32, #tpu.memory_space<vmem>>, vector<128x128xf32>
    tpu.vector_store %arg3[%c0_3, %c0_4], %2 {strides = array<i32>} : memref<128x128xf32, #tpu.memory_space<vmem>>, vector<128x128xf32>,
    return
  }
  func.func @transform_0(%arg0: i32) -> (i32, i32) {
    %c0_i32 = arith.constant 0 : i32
    %c0_i32_0 = arith.constant 0 : i32
    return %arg0, %c0_i32 : i32, i32
  }
  func.func @transform_1(%arg0: i32) -> (i32, i32) {
    %c0_i32 = arith.constant 0 : i32
    %c0_i32_0 = arith.constant 0 : i32
    %c0_i32_1 = arith.constant 0 : i32
    return %c0_i32, %c0_i32_0 : i32, i32
  }
  func.func @transform_2(%arg0: i32) -> (i32, i32) {
    %c0_i32 = arith.constant 0 : i32
    %c0_i32_0 = arith.constant 0 : i32
    return %arg0, %c0_i32 : i32, i32
  }
}

</mosaic_0001>

<llo_original>
// kernel: tpu_custom_call.1
$region0: #{tpu_custom_call.1}
  #allocation0 [shape = 'u32[]', space=smem, size = 0x4, offset = 0x4, fixed_abs, tag = 'smem constant byte address 0x4 - core index']
  #allocation1 [shape = 'u32[72,128]{1,0:T(1,128)}', space=vmem, size = 0x9000, scoped, tag = 'internal scratch']
  %s0 = inlined_call_operand.hbm [shape: bf16[128,128], index: 0, kind: input, shape index: {}]
  %s1 = inlined_call_operand.hbm [shape: bf16[128,128], index: 1, kind: input, shape index: {}]
  %s2 = inlined_call_operand.hbm [shape: f32[128,128], index: 2, kind: output, shape index: {}]
  %s3 = sld [smem:[#allocation0]]
  $region26: #{tpu_custom_call.1} parent=0
    _
  %s5 = ssub.s32 1, %s3
  %s6 = scalar_select 0, %s5, %s3
  $region1: #{tpu_custom_call.1} parent=0
    #allocation2 [shape = 'u8[32768]{0}', space=vmem, size = 0x8000, scoped, tag = 'input window, operand 0, single buffered']
    #allocation3 [shape = 's32[1]{0}', space=sflag, size = 0x4, scoped, tag = 'scoped memory for tpu_custom_call.1']
    #allocation4 [shape = 's32[1]{0}', space=sflag, size = 0x4, scoped, tag = 'scoped memory for tpu_custom_call.1']
    #allocation5 [shape = 'u8[32768]{0}', space=vmem, size = 0x8000, scoped, tag = 'input window, operand 1, single buffered']
    #allocation6 [shape = 's32[1]{0}', space=sflag, size = 0x4, scoped, tag = 'scoped memory for tpu_custom_call.1']
    #allocation7 [shape = 'u8[65536]{0}', space=vmem, size = 0x10000, scoped, tag = 'output window, operand 0, single buffered']
    %7 = vsyncpa [#allocation3], 0
    %8 = vsyncpa [#allocation6], 0
    %9 = vsyncpa [#allocation4], 0
    // Predicated region
    $region2: #{tpu_custom_call.1} parent=1 // pred_check
      _
    $region3: #{tpu_custom_call.1} parent=1 // pred_check_branch
      %11 = sbr.rel (0) target = $region5
    $region4: #{tpu_custom_call.1} parent=1 // pred_region
      %13 = vsyncadd [#allocation3], 0
      %s14 = sshll.u32 %s0, 4
      %s15 = int_to_ptr.hbm [resolvable:$true] %s14
      %s16 = sshll.u32 [#allocation2], 4
      %s17 = int_to_ptr.vmem [resolvable:$true] %s16
      %22 = dma.hbm_to_vmem [thread:$0]  %s15, 1024, %s17, [#allocation3], 64, 64, 4
    $region5: #{tpu_custom_call.1} parent=1 // pred_fallthru
      _
    // Predicated region
    $region6: #{tpu_custom_call.1} parent=1 // pred_check
      _
    $region7: #{tpu_custom_call.1} parent=1 // pred_check_branch
      %24 = sbr.rel (0) target = $region9
    $region8: #{tpu_custom_call.1} parent=1 // pred_region
      %26 = vsyncadd [#allocation6], 0
      %s27 = sshll.u32 %s1, 4
      %s28 = int_to_ptr.hbm [resolvable:$true] %s27
      %s29 = sshll.u32 [#allocation5], 4
      %s30 = int_to_ptr.vmem [resolvable:$true] %s29
      %35 = dma.hbm_to_vmem [thread:$0]  %s28, 1024, %s30, [#allocation6], 64, 64, 4
    $region9: #{tpu_custom_call.1} parent=1 // pred_fallthru
      _
    // Predicated region
    $region10: #{tpu_custom_call.1} parent=1 // pred_check
      _
    $region11: #{tpu_custom_call.1} parent=1 // pred_check_branch
      %37 = sbr.rel (0) target = $region13
    $region12: #{tpu_custom_call.1} parent=1 // pred_region
      %39 = dma.done [#allocation3], 1024
    $region13: #{tpu_custom_call.1} parent=1 // pred_fallthru
      _
    // Predicated region
    $region14: #{tpu_custom_call.1} parent=1 // pred_check
      _
    $region15: #{tpu_custom_call.1} parent=1 // pred_check_branch
      %41 = sbr.rel (0) target = $region17
    $region16: #{tpu_custom_call.1} parent=1 // pred_region
      %43 = dma.done [#allocation6], 1024
    $region17: #{tpu_custom_call.1} parent=1 // pred_fallthru
      _
    %v44 = vld [vmem:[#allocation2] sm:$0xf]
    %v45 = vld [vmem:[#allocation2 + $0x4] sm:$0xf]
    %v46 = vld [vmem:[#allocation2 + $0x8] sm:$0xf]
    %v47 = vld [vmem:[#allocation2 + $0xc] sm:$0xf]
    %v48 = vld [vmem:[#allocation2 + $0x10] sm:$0xf]
    %v49 = vld [vmem:[#allocation2 + $0x14] sm:$0xf]
    %v50 = vld [vmem:[#allocation2 + $0x18] sm:$0xf]
    %v51 = vld [vmem:[#allocation2 + $0x1c] sm:$0xf]
    %v52 = vld [vmem:[#allocation2 + $0x20] sm:$0xf]
    %v53 = vld [vmem:[#allocation2 + $0x24] sm:$0xf]
    %v54 = vld [vmem:[#allocation2 + $0x28] sm:$0xf]
    %v55 = vld [vmem:[#allocation2 + $0x2c] sm:$0xf]
    %v56 = vld [vmem:[#allocation2 + $0x30] sm:$0xf]
    %v57 = vld [vmem:[#allocation2 + $0x34] sm:$0xf]
    %v58 = vld [vmem:[#allocation2 + $0x38] sm:$0xf]
    %v59 = vld [vmem:[#allocation2 + $0x3c] sm:$0xf]
    %v60 = vld [vmem:[#allocation5] sm:$0xf]
    %v61 = vld [vmem:[#allocation5 + $0x4] sm:$0xf]
    %v62 = vld [vmem:[#allocation5 + $0x8] sm:$0xf]
    %v63 = vld [vmem:[#allocation5 + $0xc] sm:$0xf]
    %v64 = vld [vmem:[#allocation5 + $0x10] sm:$0xf]
    %v65 = vld [vmem:[#allocation5 + $0x14] sm:$0xf]
    %v66 = vld [vmem:[#allocation5 + $0x18] sm:$0xf]
    %v67 = vld [vmem:[#allocation5 + $0x1c] sm:$0xf]
    %v68 = vld [vmem:[#allocation5 + $0x20] sm:$0xf]
    %v69 = vld [vmem:[#allocation5 + $0x24] sm:$0xf]
    %v70 = vld [vmem:[#allocation5 + $0x28] sm:$0xf]
    %v71 = vld [vmem:[#allocation5 + $0x2c] sm:$0xf]
    %v72 = vld [vmem:[#allocation5 + $0x30] sm:$0xf]
    %v73 = vld [vmem:[#allocation5 + $0x34] sm:$0xf]
    %v74 = vld [vmem:[#allocation5 + $0x38] sm:$0xf]
    %v75 = vld [vmem:[#allocation5 + $0x3c] sm:$0xf]
    %v92 = vunpack.c.l.b16 %v44
    %v93 = vunpack.c.l.b16 %v45
    %v94 = vunpack.c.l.b16 %v46
    %v95 = vunpack.c.l.b16 %v47
    %v96 = vunpack.c.l.b16 %v48
    %v97 = vunpack.c.l.b16 %v49
    %v98 = vunpack.c.l.b16 %v50
    %v99 = vunpack.c.l.b16 %v51
    %v100 = vunpack.c.l.b16 %v52
    %v101 = vunpack.c.l.b16 %v53
    %v102 = vunpack.c.l.b16 %v54
    %v103 = vunpack.c.l.b16 %v55
    %v104 = vunpack.c.l.b16 %v56
    %v105 = vunpack.c.l.b16 %v57
    %v106 = vunpack.c.l.b16 %v58
    %v107 = vunpack.c.l.b16 %v59
    %v108 = vpack.c.b16 %v93, %v92
    %v109 = vpack.c.b16 %v95, %v94
    %v110 = vpack.c.b16 %v97, %v96
    %v111 = vpack.c.b16 %v99, %v98
    %v112 = vpack.c.b16 %v101, %v100
    %v113 = vpack.c.b16 %v103, %v102
    %v114 = vpack.c.b16 %v105, %v104
    %v115 = vpack.c.b16 %v107, %v106
    %v140 = vunpack.c.l.b16 %v60
    %v141 = vunpack.c.l.b16 %v61
    %v142 = vunpack.c.l.b16 %v62
    %v143 = vunpack.c.l.b16 %v63
    %v144 = vunpack.c.l.b16 %v64
    %v145 = vunpack.c.l.b16 %v65
    %v146 = vunpack.c.l.b16 %v66
    %v147 = vunpack.c.l.b16 %v67
    %v148 = vunpack.c.l.b16 %v68
    %v149 = vunpack.c.l.b16 %v69
    %v150 = vunpack.c.l.b16 %v70
    %v151 = vunpack.c.l.b16 %v71
    %v152 = vunpack.c.l.b16 %v72
    %v153 = vunpack.c.l.b16 %v73
    %v154 = vunpack.c.l.b16 %v74
    %v155 = vunpack.c.l.b16 %v75
    %v156 = vpack.c.b16 %v141, %v140
    %v157 = vpack.c.b16 %v143, %v142
    %v158 = vpack.c.b16 %v145, %v144
    %v159 = vpack.c.b16 %v147, %v146
    %v160 = vpack.c.b16 %v149, %v148
    %v161 = vpack.c.b16 %v151, %v150
    %v162 = vpack.c.b16 %v153, %v152
    %v163 = vpack.c.b16 %v155, %v154
    %172 = vmatpush.bf16.msra.mxu0 %v163
    %173 = vmatpush.bf16.msra.mxu0 %v162
    %174 = vmatpush.bf16.msra.mxu0 %v161
    %175 = vmatpush.bf16.msra.mxu0 %v160
    %176 = vmatpush.bf16.msra.mxu0 %v159
    %177 = vmatpush.bf16.msra.mxu0 %v158
    %178 = vmatpush.bf16.msra.mxu0 %v157
    %179 = vmatpush.bf16.msra.mxu0 %v156
    %180 = vmatmul.bf16.gmra.mxu0 %v108
    %v181 = vpop.f32.mrf.mxu0
    %v182 = vadd.f32 0.0, %v181
    %v183 = vpop.f32.mrf.mxu0
    %v184 = vadd.f32 0.0, %v183
    %185 = vmatmul.bf16.gmra.mxu0 %v109
    %v186 = vpop.f32.mrf.mxu0
    %v187 = vadd.f32 0.0, %v186
    %v188 = vpop.f32.mrf.mxu0
    %v189 = vadd.f32 0.0, %v188
    %190 = vmatmul.bf16.gmra.mxu0 %v110
    %v191 = vpop.f32.mrf.mxu0
    %v192 = vadd.f32 0.0, %v191
    %v193 = vpop.f32.mrf.mxu0
    %v194 = vadd.f32 0.0, %v193
    %195 = vmatmul.bf16.gmra.mxu0 %v111
    %v196 = vpop.f32.mrf.mxu0
    %v197 = vadd.f32 0.0, %v196
    %v198 = vpop.f32.mrf.mxu0
    %v199 = vadd.f32 0.0, %v198
    %200 = vmatmul.bf16.gmra.mxu0 %v112
    %v201 = vpop.f32.mrf.mxu0
    %v202 = vadd.f32 0.0, %v201
    %v203 = vpop.f32.mrf.mxu0
    %v204 = vadd.f32 0.0, %v203
    %205 = vmatmul.bf16.gmra.mxu0 %v113
    %v206 = vpop.f32.mrf.mxu0
    %v207 = vadd.f32 0.0, %v206
    %v208 = vpop.f32.mrf.mxu0
    %v209 = vadd.f32 0.0, %v208
    %210 = vmatmul.bf16.gmra.mxu0 %v114
    %v211 = vpop.f32.mrf.mxu0
    %v212 = vadd.f32 0.0, %v211
    %v213 = vpop.f32.mrf.mxu0
    %v214 = vadd.f32 0.0, %v213
    %215 = vmatmul.bf16.gmra.mxu0 %v115
    %v216 = vpop.f32.mrf.mxu0
    %v217 = vadd.f32 0.0, %v216
    %v218 = vpop.f32.mrf.mxu0
    %v219 = vadd.f32 0.0, %v218
    %220 = vdwg.mxu0
    %221 = vst [vmem:[#allocation7] sm:$0xff] %v182
    %222 = vst [vmem:[#allocation7 + $0x8] sm:$0xff] %v184
    %223 = vst [vmem:[#allocation7 + $0x10] sm:$0xff] %v187
    %224 = vst [vmem:[#allocation7 + $0x18] sm:$0xff] %v189
    %225 = vst [vmem:[#allocation7 + $0x20] sm:$0xff] %v192
    %226 = vst [vmem:[#allocation7 + $0x28] sm:$0xff] %v194
    %227 = vst [vmem:[#allocation7 + $0x30] sm:$0xff] %v197
    %228 = vst [vmem:[#allocation7 + $0x38] sm:$0xff] %v199
    %229 = vst [vmem:[#allocation7 + $0x40] sm:$0xff] %v202
    %230 = vst [vmem:[#allocation7 + $0x48] sm:$0xff] %v204
    %231 = vst [vmem:[#allocation7 + $0x50] sm:$0xff] %v207
    %232 = vst [vmem:[#allocation7 + $0x58] sm:$0xff] %v209
    %233 = vst [vmem:[#allocation7 + $0x60] sm:$0xff] %v212
    %234 = vst [vmem:[#allocation7 + $0x68] sm:$0xff] %v214
    %235 = vst [vmem:[#allocation7 + $0x70] sm:$0xff] %v217
    %236 = vst [vmem:[#allocation7 + $0x78] sm:$0xff] %v219
    // Predicated region
    $region18: #{tpu_custom_call.1} parent=1 // pred_check
      _
    $region19: #{tpu_custom_call.1} parent=1 // pred_check_branch
      %238 = sbr.rel (0) target = $region21
    $region20: #{tpu_custom_call.1} parent=1 // pred_region
      %240 = vsyncadd [#allocation4], 0
      %s241 = sshll.u32 [#allocation7], 4
      %s242 = int_to_ptr.vmem [resolvable:$true] %s241
      %s243 = sshll.u32 %s2, 4
      %s244 = int_to_ptr.hbm [resolvable:$true] %s243
      %249 = dma.vmem_to_hbm [thread:$0]  %s242, 2048, %s244, [#allocation4], 128, 128, 8
    $region21: #{tpu_custom_call.1} parent=1 // pred_fallthru
      _
    // Predicated region
    $region22: #{tpu_custom_call.1} parent=1 // pred_check
      _
    $region23: #{tpu_custom_call.1} parent=1 // pred_check_branch
      %251 = sbr.rel (0) target = $region25
    $region24: #{tpu_custom_call.1} parent=1 // pred_region
      %253 = dma.done [#allocation4], 2048
    $region25: #{tpu_custom_call.1} parent=1 // pred_fallthru
      _
    %254 = vsyncpa [#allocation3], 1
    %255 = vsyncpa [#allocation6], 1
    %256 = vsyncpa [#allocation4], 1

</llo_original>
